<compile_context>
chip_gen: v5e
topology: v5e:2x2
jax: 0.10.0
libtpu: 0.0.40
codegen_flags: <defaults>
</compile_context>

<pallas_src>
import functools

import jax
import jax.numpy as jnp
from jax.experimental import pallas as pl
from jax.experimental.pallas import tpu as pltpu


def _round_up(x, m):
    return (x + m - 1) // m * m


# -----------------------------------------------------------------------------
# Kernel
# -----------------------------------------------------------------------------
def _policy_kernel(layout, batch, b_pad, data_size, state_size, action_size,
                   out_lanes, acts_ref, p_ref, out_ref):
    """Full forward in one program (grid=()).

    layout[i] = (row_offset, rows, cols) of packed parameter i (static ints).
    Param order: dw1, db1, dw2, db2, dw3, db3, sw1, sb1, sw2, sb2, sw3, sb3, aw, ab.
    acts_ref rows: [0, b_pad) = state, [b_pad, 2*b_pad) = x1, [2*b_pad, 3*b_pad) = x2.
    """
    d, s = data_size, state_size

    def get(i):
        r0, r, c = layout[i]
        return p_ref[r0:r0 + r, :c]

    def linear(x, wi, bi):
        return jnp.dot(x, get(wi), preferred_element_type=jnp.float32) + get(bi)

    # Carve activations from the single packed buffer (2 input DMAs total).
    x12 = acts_ref[b_pad:3 * b_pad, :d]      # stacked [x1; x2]: data MLP runs once
    st = acts_ref[0:b_pad, :s]

    # Shared data MLP: [2*b_pad, D] -> D^2 -> D^2 -> D.
    h = jnp.maximum(linear(x12, 0, 1), 0.0)
    h = jnp.maximum(linear(h, 2, 3), 0.0)
    h = linear(h, 4, 5)

    # State MLP: [b_pad, S] -> 2S -> 2S -> S.
    hs = jnp.maximum(linear(st, 6, 7), 0.0)
    hs = jnp.maximum(linear(hs, 8, 9), 0.0)
    xs = linear(hs, 10, 11)

    # action_select(concat([x1, x2, x_state], 1)) as exact split matmuls against
    # 128-multiple-wide column slices of the packed action weight (padding
    # columns are zero), keeping everything downstream lane-dense.
    aw_r0 = layout[12][0]
    ab_r0 = layout[13][0]
    aw1 = p_ref[aw_r0:aw_r0 + d, :out_lanes]                    # rows for x1
    aw2 = p_ref[aw_r0 + d:aw_r0 + 2 * d, :out_lanes]            # rows for x2
    aw3 = p_ref[aw_r0 + 2 * d:aw_r0 + 2 * d + s, :out_lanes]    # rows for x_state
    ab = p_ref[ab_r0:ab_r0 + 1, :out_lanes]

    h1 = h[0:batch]                   # x1 outputs (drop batch padding rows)
    h2 = h[b_pad:b_pad + batch]       # x2 outputs
    x_state = xs[0:batch]

    logits = (jnp.dot(h1, aw1, preferred_element_type=jnp.float32)
              + jnp.dot(h2, aw2, preferred_element_type=jnp.float32)
              + jnp.dot(x_state, aw3, preferred_element_type=jnp.float32)
              + ab)                   # [batch, out_lanes]

    # Mask padding lanes, exact row-wise softmax (exact divide keeps per-element
    # values close to the PyTorch reference; this kernel is overhead-bound so
    # the divide costs nothing).
    lane = jax.lax.broadcasted_iota(jnp.int32, (batch, out_lanes), 1)
    logits = jnp.where(lane < action_size, logits, jnp.float32(-1e30))
    m = jnp.max(logits, axis=-1, keepdims=True)
    e = jnp.exp(logits - m)                          # padding lanes underflow to 0
    probs = e / jnp.sum(e, axis=-1, keepdims=True)

    # Batch mean, +epsilon on valid lanes only, exact renormalization, and one
    # full-width unmasked store.
    mean = jnp.mean(probs, axis=0, keepdims=True)    # (1, out_lanes)
    lane_row = jax.lax.broadcasted_iota(jnp.int32, (1, out_lanes), 1)
    adj = jnp.where(lane_row < action_size, mean + jnp.float32(0.05),
                    jnp.float32(0.0))
    out_ref[...] = adj / jnp.sum(adj)


# -----------------------------------------------------------------------------
# Parameters (PyTorch nn.Linear-style init) and packing
# -----------------------------------------------------------------------------
def _init_linear(key, fan_in, fan_out):
    kw, kb = jax.random.split(key)
    bound = 1.0 / jnp.sqrt(jnp.float32(fan_in))
    w = jax.random.uniform(kw, (fan_in, fan_out), jnp.float32, -bound, bound)
    b = jax.random.uniform(kb, (1, fan_out), jnp.float32, -bound, bound)
    return w, b


def make_params(key, state_size, data_size, action_size):
    ks = jax.random.split(key, 7)
    d2 = data_size * data_size
    s2 = state_size * 2
    dw1, db1 = _init_linear(ks[0], data_size, d2)
    dw2, db2 = _init_linear(ks[1], d2, d2)
    dw3, db3 = _init_linear(ks[2], d2, data_size)
    sw1, sb1 = _init_linear(ks[3], state_size, s2)
    sw2, sb2 = _init_linear(ks[4], s2, s2)
    sw3, sb3 = _init_linear(ks[5], s2, state_size)
    # action head: in_features = data + data + state (concat order [x1, x2, x_state])
    aw, ab = _init_linear(ks[6], 2 * data_size + state_size, action_size)
    return [dw1, db1, dw2, db2, dw3, db3,
            sw1, sb1, sw2, sb2, sw3, sb3,
            aw, ab]


_WEIGHT_IDX = (0, 2, 4, 6, 8, 10, 12)
_BIAS_IDX = (1, 3, 5, 7, 9, 11, 13)


def pack_params(params, param_dtype=jnp.float32):
    """Pack all 14 tensors into one [R, 128k] buffer (single param DMA).

    Weights: rows padded to a multiple of 8, concatenated.
    Biases: all 7 stacked into ONE 8-row block (one sublane each).
    Columns zero-padded to a common 128-multiple lane width.
    (param_dtype=jnp.bfloat16 halves param DMA bytes once d^2 dominates; f32
    kept here for reference fidelity — dots accumulate in f32 either way.)
    Returns (packed_buffer, layout) with layout[i] = (row_offset, rows, cols).
    """
    pad_w = _round_up(max(int(p.shape[1]) for p in params), 128)
    layout = [None] * len(params)
    blocks, row = [], 0
    for i in _WEIGHT_IDX:
        w = params[i].astype(jnp.float32)
        r, c = int(w.shape[0]), int(w.shape[1])
        r_pad = _round_up(r, 8)
        blk = jnp.zeros((r_pad, pad_w), jnp.float32).at[:r, :c].set(w)
        blocks.append(blk)
        layout[i] = (row, r, c)
        row += r_pad
    bias_rows = _round_up(len(_BIAS_IDX), 8)
    bias_blk = jnp.zeros((bias_rows, pad_w), jnp.float32)
    for j, i in enumerate(_BIAS_IDX):
        b = params[i].astype(jnp.float32).reshape(1, -1)
        c = int(b.shape[1])
        bias_blk = bias_blk.at[j, :c].set(b[0])
        layout[i] = (row + j, 1, c)
    blocks.append(bias_blk)
    packed = jnp.concatenate(blocks, axis=0).astype(param_dtype)
    return packed, tuple(layout)


def pack_activations(state, x1, x2):
    """Pack state/x1/x2 into one zero-padded buffer (one DMA instead of three)."""
    batch = state.shape[0]
    b_pad = _round_up(batch, 8)
    lanes = _round_up(max(int(state.shape[1]), int(x1.shape[1])), 128)
    acts = jnp.zeros((3 * b_pad, lanes), jnp.float32)
    acts = acts.at[:batch, :state.shape[1]].set(state.astype(jnp.float32))
    acts = acts.at[b_pad:b_pad + batch, :x1.shape[1]].set(x1.astype(jnp.float32))
    acts = acts.at[2 * b_pad:2 * b_pad + batch, :x2.shape[1]].set(x2.astype(jnp.float32))
    return acts, b_pad


# -----------------------------------------------------------------------------
# Wrapper
# -----------------------------------------------------------------------------
def policy_network_forward(state, x1, x2, packed, layout, action_size):
    batch, state_size = state.shape
    data_size = int(x1.shape[1])
    d2 = data_size * data_size
    s2 = state_size * 2

    acts, b_pad = pack_activations(state, x1, x2)
    out_lanes = _round_up(action_size, 128)

    # VMEM sizing: inputs + dominant live intermediates + headroom.
    bytes_in = 4 * (acts.size) + packed.size * jnp.dtype(packed.dtype).itemsize
    bytes_scratch = 4 * (2 * b_pad) * max(_round_up(d2, 128),
                                          _round_up(s2, 128), out_lanes) * 4
    est = int(bytes_in + bytes_scratch + (1 << 20))
    # Single-block path must stay well under v5e's 16 MiB default scoped VMEM.
    if est > 12 * 1024 * 1024:
        # TODO(synk): K-tile the d^2 x d^2 middle Linear (grid over K, VMEM f32
        # accumulator, pl.when init/finalize) sized for v7x's 64 MiB physical VMEM.
        raise ValueError("packed params too large for the single-block VMEM path")
    vmem_limit = int(min(max(2 * est, 16 * 1024 * 1024), 48 * 1024 * 1024))

    flops = 2 * batch * (2 * (data_size * d2 + d2 * d2 + d2 * data_size)
                         + state_size * s2 + s2 * s2 + s2 * state_size
                         + (2 * data_size + state_size) * action_size)
    cost = pl.CostEstimate(
        flops=int(flops),
        transcendentals=int(batch * action_size),
        bytes_accessed=int(bytes_in + 4 * out_lanes),
    )

    vmem_spec = pl.BlockSpec(memory_space=pltpu.MemorySpace.VMEM)
    kernel = functools.partial(
        _policy_kernel, layout, int(batch), int(b_pad),
        data_size, int(state_size), int(action_size), int(out_lanes))

    out = pl.pallas_call(
        kernel,
        out_shape=jax.ShapeDtypeStruct((1, out_lanes), jnp.float32),
        in_specs=[vmem_spec, vmem_spec],
        out_specs=vmem_spec,
        compiler_params=pltpu.CompilerParams(vmem_limit_bytes=vmem_limit),
        cost_estimate=cost,
    )(acts, packed)
    return out[0, :action_size]


# -----------------------------------------------------------------------------
# Pure-JAX reference (mirrors the PyTorch forward)
# -----------------------------------------------------------------------------
def _reference_forward(params, state, x1, x2):
    dw1, db1, dw2, db2, dw3, db3, sw1, sb1, sw2, sb2, sw3, sb3, aw, ab = params

    def mlp3(x, w1, b1, w2, b2, w3, b3):
        x = jnp.maximum(x @ w1 + b1, 0.0)
        x = jnp.maximum(x @ w2 + b2, 0.0)
        return x @ w3 + b3

    y1 = mlp3(x1, dw1, db1, dw2, db2, dw3, db3)
    y2 = mlp3(x2, dw1, db1, dw2, db2, dw3, db3)
    ys = mlp3(state, sw1, sb1, sw2, sb2, sw3, sb3)
    x = jnp.concatenate([y1, y2, ys], axis=1)
    p = jax.nn.softmax(x @ aw + ab, axis=-1)
    adj = p.mean(axis=0) + 0.05
    return adj / adj.sum()


if __name__ == "__main__":
    # Small, forward-consistent shapes.
    batch = 8
    state_size = 16
    data_size = 8
    action_size = 4

    root = jax.random.PRNGKey(0)
    k_state, k_x1, k_x2, k_params = jax.random.split(root, 4)

    state = jax.random.normal(k_state, (batch, state_size), jnp.float32)
    x1 = jax.random.normal(k_x1, (batch, data_size), jnp.float32)
    x2 = jax.random.normal(k_x2, (batch, data_size), jnp.float32)

    params = make_params(k_params, state_size, data_size, action_size)
    packed, layout = pack_params(params)

    out = policy_network_forward(state, x1, x2, packed, layout, action_size)
    out = jax.block_until_ready(out)

    assert out.shape == (action_size,)
    assert bool(jnp.isfinite(out).all())
    # Normalized probability vector (final renorm is an exact divide).
    assert abs(float(jnp.sum(out)) - 1.0) < 1e-5

    # Per-element check against the pure-JAX reference (loose tolerance to
    # absorb MXU-vs-XLA f32 matmul precision differences).
    ref = jax.block_until_ready(_reference_forward(params, state, x1, x2))
    assert bool(jnp.allclose(out, ref, atol=1e-3, rtol=1e-3))

    print("KERNEL_OK")
</pallas_src>

<mosaic_0001>
module attributes {stable_mosaic.version = 11 : i64} {
  func.func @_policy_kernel(%arg0: memref<24x128xf32, #tpu.memory_space<vmem>>, %arg1: memref<256x128xf32, #tpu.memory_space<vmem>>, %arg2: memref<1x128xf32, #tpu.memory_space<vmem>>) attributes {dimension_semantics = [], scalar_prefetch = 0 : i64, scratch_operands = 0 : i64, tpu.core_type = #tpu.core_type<tc>} {
    %c8 = arith.constant 8 : index
    %c0 = arith.constant 0 : index
    %0 = vector.load %arg0[%c8, %c0] : memref<24x128xf32, #tpu.memory_space<vmem>>, vector<16x8xf32>
    %c0_0 = arith.constant 0 : index
    %c0_1 = arith.constant 0 : index
    %1 = vector.load %arg0[%c0_0, %c0_1] : memref<24x128xf32, #tpu.memory_space<vmem>>, vector<8x16xf32>
    %c0_2 = arith.constant 0 : index
    %c0_3 = arith.constant 0 : index
    %2 = vector.load %arg1[%c0_2, %c0_3] : memref<256x128xf32, #tpu.memory_space<vmem>>, vector<8x64xf32>
    %cst = arith.constant dense<0.000000e+00> : vector<16x64xf32>
    %3 = tpu.matmul %0, %2, %cst {dimension_numbers = #tpu.dot_dimension_numbers<[1], [0], [0], [1], [0, 0, 1, 1], [], []>} : vector<16x8xf32>, vector<8x64xf32>, vector<16x64xf32> -> vector<16x64xf32>
    %c248 = arith.constant 248 : index
    %c0_4 = arith.constant 0 : index
    %4 = vector.load %arg1[%c248, %c0_4] : memref<256x128xf32, #tpu.memory_space<vmem>>, vector<1x64xf32>
    %5 = vector.broadcast %4 : vector<1x64xf32> to vector<16x64xf32>
    %6 = arith.addf %3, %5 : vector<16x64xf32>
    %cst_5 = arith.constant 0.000000e+00 : f32
    %7 = vector.broadcast %cst_5 : f32 to vector<16x64xf32>
    %8 = arith.maximumf %6, %7 : vector<16x64xf32>
    %c8_6 = arith.constant 8 : index
    %c0_7 = arith.constant 0 : index
    %9 = vector.load %arg1[%c8_6, %c0_7] : memref<256x128xf32, #tpu.memory_space<vmem>>, vector<64x64xf32>
    %cst_8 = arith.constant dense<0.000000e+00> : vector<16x64xf32>
    %10 = tpu.matmul %8, %9, %cst_8 {dimension_numbers = #tpu.dot_dimension_numbers<[1], [0], [0], [1], [0, 0, 1, 1], [], []>} : vector<16x64xf32>, vector<64x64xf32>, vector<16x64xf32> -> vector<16x64xf32>
    %c249 = arith.constant 249 : index
    %c0_9 = arith.constant 0 : index
    %11 = vector.load %arg1[%c249, %c0_9] : memref<256x128xf32, #tpu.memory_space<vmem>>, vector<1x64xf32>
    %12 = vector.broadcast %11 : vector<1x64xf32> to vector<16x64xf32>
    %13 = arith.addf %10, %12 : vector<16x64xf32>
    %cst_10 = arith.constant 0.000000e+00 : f32
    %14 = vector.broadcast %cst_10 : f32 to vector<16x64xf32>
    %15 = arith.maximumf %13, %14 : vector<16x64xf32>
    %c72 = arith.constant 72 : index
    %c0_11 = arith.constant 0 : index
    %16 = vector.load %arg1[%c72, %c0_11] : memref<256x128xf32, #tpu.memory_space<vmem>>, vector<64x8xf32>
    %cst_12 = arith.constant dense<0.000000e+00> : vector<16x8xf32>
    %17 = tpu.matmul %15, %16, %cst_12 {dimension_numbers = #tpu.dot_dimension_numbers<[1], [0], [0], [1], [0, 0, 1, 1], [], []>} : vector<16x64xf32>, vector<64x8xf32>, vector<16x8xf32> -> vector<16x8xf32>
    %c250 = arith.constant 250 : index
    %c0_13 = arith.constant 0 : index
    %18 = vector.load %arg1[%c250, %c0_13] : memref<256x128xf32, #tpu.memory_space<vmem>>, vector<1x8xf32>
    %19 = vector.broadcast %18 : vector<1x8xf32> to vector<16x8xf32>
    %20 = arith.addf %17, %19 : vector<16x8xf32>
    %c136 = arith.constant 136 : index
    %c0_14 = arith.constant 0 : index
    %21 = vector.load %arg1[%c136, %c0_14] : memref<256x128xf32, #tpu.memory_space<vmem>>, vector<16x32xf32>
    %cst_15 = arith.constant dense<0.000000e+00> : vector<8x32xf32>
    %22 = tpu.matmul %1, %21, %cst_15 {dimension_numbers = #tpu.dot_dimension_numbers<[1], [0], [0], [1], [0, 0, 1, 1], [], []>} : vector<8x16xf32>, vector<16x32xf32>, vector<8x32xf32> -> vector<8x32xf32>
    %c251 = arith.constant 251 : index
    %c0_16 = arith.constant 0 : index
    %23 = vector.load %arg1[%c251, %c0_16] : memref<256x128xf32, #tpu.memory_space<vmem>>, vector<1x32xf32>
    %24 = vector.broadcast %23 : vector<1x32xf32> to vector<8x32xf32>
    %25 = arith.addf %22, %24 : vector<8x32xf32>
    %cst_17 = arith.constant 0.000000e+00 : f32
    %26 = vector.broadcast %cst_17 : f32 to vector<8x32xf32>
    %27 = arith.maximumf %25, %26 : vector<8x32xf32>
    %c152 = arith.constant 152 : index
    %c0_18 = arith.constant 0 : index
    %28 = vector.load %arg1[%c152, %c0_18] : memref<256x128xf32, #tpu.memory_space<vmem>>, vector<32x32xf32>
    %cst_19 = arith.constant dense<0.000000e+00> : vector<8x32xf32>
    %29 = tpu.matmul %27, %28, %cst_19 {dimension_numbers = #tpu.dot_dimension_numbers<[1], [0], [0], [1], [0, 0, 1, 1], [], []>} : vector<8x32xf32>, vector<32x32xf32>, vector<8x32xf32> -> vector<8x32xf32>
    %c252 = arith.constant 252 : index
    %c0_20 = arith.constant 0 : index
    %30 = vector.load %arg1[%c252, %c0_20] : memref<256x128xf32, #tpu.memory_space<vmem>>, vector<1x32xf32>
    %31 = vector.broadcast %30 : vector<1x32xf32> to vector<8x32xf32>
    %32 = arith.addf %29, %31 : vector<8x32xf32>
    %cst_21 = arith.constant 0.000000e+00 : f32
    %33 = vector.broadcast %cst_21 : f32 to vector<8x32xf32>
    %34 = arith.maximumf %32, %33 : vector<8x32xf32>
    %c184 = arith.constant 184 : index
    %c0_22 = arith.constant 0 : index
    %35 = vector.load %arg1[%c184, %c0_22] : memref<256x128xf32, #tpu.memory_space<vmem>>, vector<32x16xf32>
    %cst_23 = arith.constant dense<0.000000e+00> : vector<8x16xf32>
    %36 = tpu.matmul %34, %35, %cst_23 {dimension_numbers = #tpu.dot_dimension_numbers<[1], [0], [0], [1], [0, 0, 1, 1], [], []>} : vector<8x32xf32>, vector<32x16xf32>, vector<8x16xf32> -> vector<8x16xf32>
    %c253 = arith.constant 253 : index
    %c0_24 = arith.constant 0 : index
    %37 = vector.load %arg1[%c253, %c0_24] : memref<256x128xf32, #tpu.memory_space<vmem>>, vector<1x16xf32>
    %38 = vector.broadcast %37 : vector<1x16xf32> to vector<8x16xf32>
    %39 = arith.addf %36, %38 : vector<8x16xf32>
    %c216 = arith.constant 216 : index
    %c0_25 = arith.constant 0 : index
    %40 = vector.load %arg1[%c216, %c0_25] : memref<256x128xf32, #tpu.memory_space<vmem>>, vector<8x128xf32>
    %c224 = arith.constant 224 : index
    %c0_26 = arith.constant 0 : index
    %41 = vector.load %arg1[%c224, %c0_26] : memref<256x128xf32, #tpu.memory_space<vmem>>, vector<8x128xf32>
    %c232 = arith.constant 232 : index
    %c0_27 = arith.constant 0 : index
    %42 = vector.load %arg1[%c232, %c0_27] : memref<256x128xf32, #tpu.memory_space<vmem>>, vector<16x128xf32>
    %c254 = arith.constant 254 : index
    %c0_28 = arith.constant 0 : index
    %43 = vector.load %arg1[%c254, %c0_28] : memref<256x128xf32, #tpu.memory_space<vmem>>, vector<1x128xf32>
    %44 = vector.extract_strided_slice %20 {offsets = [0, 0], sizes = [8, 8], strides = [1, 1]} : vector<16x8xf32> to vector<8x8xf32>
    %45 = vector.extract_strided_slice %20 {offsets = [8, 0], sizes = [8, 8], strides = [1, 1]} : vector<16x8xf32> to vector<8x8xf32>
    %cst_29 = arith.constant dense<0.000000e+00> : vector<8x128xf32>
    %46 = tpu.matmul %44, %40, %cst_29 {dimension_numbers = #tpu.dot_dimension_numbers<[1], [0], [0], [1], [0, 0, 1, 1], [], []>} : vector<8x8xf32>, vector<8x128xf32>, vector<8x128xf32> -> vector<8x128xf32>
    %cst_30 = arith.constant dense<0.000000e+00> : vector<8x128xf32>
    %47 = tpu.matmul %45, %41, %cst_30 {dimension_numbers = #tpu.dot_dimension_numbers<[1], [0], [0], [1], [0, 0, 1, 1], [], []>} : vector<8x8xf32>, vector<8x128xf32>, vector<8x128xf32> -> vector<8x128xf32>
    %48 = arith.addf %46, %47 : vector<8x128xf32>
    %cst_31 = arith.constant dense<0.000000e+00> : vector<8x128xf32>
    %49 = tpu.matmul %39, %42, %cst_31 {dimension_numbers = #tpu.dot_dimension_numbers<[1], [0], [0], [1], [0, 0, 1, 1], [], []>} : vector<8x16xf32>, vector<16x128xf32>, vector<8x128xf32> -> vector<8x128xf32>
    %50 = arith.addf %48, %49 : vector<8x128xf32>
    %51 = vector.broadcast %43 : vector<1x128xf32> to vector<8x128xf32>
    %52 = arith.addf %50, %51 : vector<8x128xf32>
    %53 = tpu.iota {dimensions = array<i32: 1>} : vector<8x128xi32>
    %c4_i32 = arith.constant 4 : i32
    %54 = vector.broadcast %c4_i32 : i32 to vector<8x128xi32>
    %55 = arith.cmpi slt, %53, %54 : vector<8x128xi32>
    %cst_32 = arith.constant -1.000000e+30 : f32
    %56 = vector.broadcast %cst_32 : f32 to vector<8x128xf32>
    %57 = arith.select %55, %52, %56 : vector<8x128xi1>, vector<8x128xf32>
    %cst_33 = arith.constant dense<0xFF800000> : vector<8xf32>
    %58 = vector.multi_reduction <maximumf>, %57, %cst_33 [1] : vector<8x128xf32> to vector<8xf32>
    %59 = vector.shape_cast %58 : vector<8xf32> to vector<8x1xf32>
    %60 = vector.broadcast %59 : vector<8x1xf32> to vector<8x128xf32>
    %61 = arith.subf %57, %60 : vector<8x128xf32>
    %62 = math.exp %61 : vector<8x128xf32>
    %cst_34 = arith.constant dense<0.000000e+00> : vector<8xf32>
    %63 = vector.multi_reduction <add>, %62, %cst_34 [1] : vector<8x128xf32> to vector<8xf32>
    %64 = vector.shape_cast %63 : vector<8xf32> to vector<8x1xf32>
    %65 = vector.broadcast %64 : vector<8x1xf32> to vector<8x128xf32>
    %66 = arith.divf %62, %65 : vector<8x128xf32>
    %cst_35 = arith.constant dense<0.000000e+00> : vector<128xf32>
    %67 = vector.multi_reduction <add>, %66, %cst_35 [0] : vector<8x128xf32> to vector<128xf32>
    %68 = vector.shape_cast %67 : vector<128xf32> to vector<1x128xf32>
    %cst_36 = arith.constant 8.000000e+00 : f32
    %69 = vector.broadcast %cst_36 : f32 to vector<1x128xf32>
    %70 = arith.divf %68, %69 : vector<1x128xf32>
    %71 = tpu.iota {dimensions = array<i32: 1>} : vector<1x128xi32>
    %c4_i32_37 = arith.constant 4 : i32
    %72 = vector.broadcast %c4_i32_37 : i32 to vector<1x128xi32>
    %73 = arith.cmpi slt, %71, %72 : vector<1x128xi32>
    %cst_38 = arith.constant 5.000000e-02 : f32
    %74 = vector.broadcast %cst_38 : f32 to vector<1x128xf32>
    %75 = arith.addf %70, %74 : vector<1x128xf32>
    %cst_39 = arith.constant 0.000000e+00 : f32
    %76 = vector.broadcast %cst_39 : f32 to vector<1x128xf32>
    %77 = arith.select %73, %75, %76 : vector<1x128xi1>, vector<1x128xf32>
    %78 = vector.shape_cast %77 : vector<1x128xf32> to vector<1x1x128xf32>
    %cst_40 = arith.constant dense<0.000000e+00> : vector<1xf32>
    %79 = vector.multi_reduction <add>, %78, %cst_40 [1, 2] : vector<1x1x128xf32> to vector<1xf32>
    %80 = vector.shape_cast %79 : vector<1xf32> to vector<1x1x1xf32>
    %81 = vector.extract %80[0, 0, 0] : f32 from vector<1x1x1xf32>
    %82 = vector.broadcast %81 : f32 to vector<1x128xf32>
    %83 = arith.divf %77, %82 : vector<1x128xf32>
    %c0_41 = arith.constant 0 : index
    %c0_42 = arith.constant 0 : index
    %84 = vector.load %arg2[%c0_41, %c0_42] : memref<1x128xf32, #tpu.memory_space<vmem>>, vector<1x128xf32>
    tpu.vector_store %arg2[%c0_41, %c0_42], %83 {strides = array<i32>} : memref<1x128xf32, #tpu.memory_space<vmem>>, vector<1x128xf32>,
    return
  }
}

</mosaic_0001>

<llo_original>
// kernel: tpu_custom_call.1
$region0: #{tpu_custom_call.1}
  #allocation0 [shape = 'u32[]', space=smem, size = 0x4, offset = 0x4, fixed_abs, tag = 'smem constant byte address 0x4 - core index']
  #allocation1 [shape = 'u32[72,128]{1,0:T(1,128)}', space=vmem, size = 0x9000, scoped, tag = 'internal scratch']
  %s0 = inlined_call_operand.hbm [shape: f32[24,128], index: 0, kind: input, shape index: {}]
  %s1 = inlined_call_operand.hbm [shape: f32[256,128], index: 1, kind: input, shape index: {}]
  %s2 = inlined_call_operand.hbm [shape: f32[1,128], index: 2, kind: output, shape index: {}]
  %s3 = sld [smem:[#allocation0]]
  $region26: #{tpu_custom_call.1} parent=0
    _
  %s5 = ssub.s32 1, %s3
  %s6 = scalar_select 0, %s5, %s3
  $region1: #{tpu_custom_call.1} parent=0
    #allocation2 [shape = 'u8[12288]{0}', space=vmem, size = 0x3000, scoped, tag = 'input window, operand 0, single buffered']
    #allocation3 [shape = 's32[1]{0}', space=sflag, size = 0x4, scoped, tag = 'scoped memory for tpu_custom_call.1']
    #allocation4 [shape = 's32[1]{0}', space=sflag, size = 0x4, scoped, tag = 'scoped memory for tpu_custom_call.1']
    #allocation5 [shape = 'u8[131072]{0}', space=vmem, size = 0x20000, scoped, tag = 'input window, operand 1, single buffered']
    #allocation6 [shape = 's32[1]{0}', space=sflag, size = 0x4, scoped, tag = 'scoped memory for tpu_custom_call.1']
    #allocation7 [shape = 'u8[512]{0}', space=vmem, size = 0x400, scoped, tag = 'output window, operand 0, single buffered']
    %7 = vsyncpa [#allocation3], 0
    %8 = vsyncpa [#allocation6], 0
    %9 = vsyncpa [#allocation4], 0
    // Predicated region
    $region2: #{tpu_custom_call.1} parent=1 // pred_check
      _
    $region3: #{tpu_custom_call.1} parent=1 // pred_check_branch
      %11 = sbr.rel (0) target = $region5
    $region4: #{tpu_custom_call.1} parent=1 // pred_region
      %13 = vsyncadd [#allocation3], 0
      %s14 = sshll.u32 %s0, 4
      %s15 = int_to_ptr.hbm [resolvable:$true] %s14
      %s16 = sshll.u32 [#allocation2], 4
      %s17 = int_to_ptr.vmem [resolvable:$true] %s16
      %22 = dma.hbm_to_vmem [thread:$0]  %s15, 384, %s17, [#allocation3], 128, 128, 8
    $region5: #{tpu_custom_call.1} parent=1 // pred_fallthru
      _
    // Predicated region
    $region6: #{tpu_custom_call.1} parent=1 // pred_check
      _
    $region7: #{tpu_custom_call.1} parent=1 // pred_check_branch
      %24 = sbr.rel (0) target = $region9
    $region8: #{tpu_custom_call.1} parent=1 // pred_region
      %26 = vsyncadd [#allocation6], 0
      %s27 = sshll.u32 %s1, 4
      %s28 = int_to_ptr.hbm [resolvable:$true] %s27
      %s29 = sshll.u32 [#allocation5], 4
      %s30 = int_to_ptr.vmem [resolvable:$true] %s29
      %35 = dma.hbm_to_vmem [thread:$0]  %s28, 4096, %s30, [#allocation6], 128, 128, 8
    $region9: #{tpu_custom_call.1} parent=1 // pred_fallthru
      _
    // Predicated region
    $region10: #{tpu_custom_call.1} parent=1 // pred_check
      _
    $region11: #{tpu_custom_call.1} parent=1 // pred_check_branch
      %37 = sbr.rel (0) target = $region13
    $region12: #{tpu_custom_call.1} parent=1 // pred_region
      %39 = dma.done [#allocation3], 384
    $region13: #{tpu_custom_call.1} parent=1 // pred_fallthru
      _
    // Predicated region
    $region14: #{tpu_custom_call.1} parent=1 // pred_check
      _
    $region15: #{tpu_custom_call.1} parent=1 // pred_check_branch
      %41 = sbr.rel (0) target = $region17
    $region16: #{tpu_custom_call.1} parent=1 // pred_region
      %43 = dma.done [#allocation6], 4096
    $region17: #{tpu_custom_call.1} parent=1 // pred_fallthru
      _
    %v44 = vld [vmem:[#allocation2 + $0x8] sm:$0xff]
    %v45 = vld [vmem:[#allocation2 + $0x10] sm:$0xff]
    %v46 = vld [vmem:[#allocation2] sm:$0xff]
    %v47 = vld [vmem:[#allocation5] sm:$0xff]
    %v48 = vld [vmem:[#allocation5 + $0xf8] sm:$0x1]
    %v49 = vperm.slane %v48, 0
    %vm50 = vcmask 64512
    %v52 = vsel %vm50, %v44, 0
    %v55 = vsel %vm50, %v45, 0
    %57 = vmatpush.msra.mxu0 0.0
    %58 = vmatpush.msra.mxu0 0.0
    %59 = vmatpush.msra.mxu0 0.0
    %60 = vmatpush.msra.mxu0 0.0
    %61 = vmatpush.msra.mxu0 0.0
    %62 = vmatpush.msra.mxu0 0.0
    %63 = vmatpush.msra.mxu0 0.0
    %64 = vmatpush.msra.mxu0 0.0
    %65 = vmatpush.msra.mxu0 0.0
    %66 = vmatpush.msra.mxu0 0.0
    %67 = vmatpush.msra.mxu0 0.0
    %68 = vmatpush.msra.mxu0 0.0
    %69 = vmatpush.msra.mxu0 0.0
    %70 = vmatpush.msra.mxu0 0.0
    %71 = vmatpush.msra.mxu0 0.0
    %72 = vmatpush.msra.mxu0 %v47
    %73 = vmatmul.f32.gmra.mxu0 %v52
    %v74 = vpop.f32.mrf.mxu0
    %v75 = vadd.f32 %v49, %v74
    %76 = vmatmul.f32.gmra.mxu0 %v55
    %v77 = vpop.f32.mrf.mxu0
    %v78 = vadd.f32 %v49, %v77
    %79 = vdwg.mxu0
    %v80 = vmax.f32 %v75, 0.0
    %v81 = vmax.f32 %v78, 0.0
    %v82 = vld [vmem:[#allocation5 + $0x8] sm:$0xff]
    %v83 = vld [vmem:[#allocation5 + $0x10] sm:$0xff]
    %v84 = vld [vmem:[#allocation5 + $0x18] sm:$0xff]
    %v85 = vld [vmem:[#allocation5 + $0x20] sm:$0xff]
    %v86 = vld [vmem:[#allocation5 + $0x28] sm:$0xff]
    %v87 = vld [vmem:[#allocation5 + $0x30] sm:$0xff]
    %v88 = vld [vmem:[#allocation5 + $0x38] sm:$0xff]
    %v89 = vld [vmem:[#allocation5 + $0x40] sm:$0xff]
    %v90 = vld [vmem:[#allocation5 + $0xf9] sm:$0x1]
    %v91 = vperm.slane %v90, 0
    %vm92 = vcmask 523264
    %v94 = vsel %vm92, %v80, 0
    %v97 = vsel %vm92, %v81, 0
    %99 = vmatpush.msra.mxu0 0.0
    %100 = vmatpush.msra.mxu0 0.0
    %101 = vmatpush.msra.mxu0 0.0
    %102 = vmatpush.msra.mxu0 0.0
    %103 = vmatpush.msra.mxu0 0.0
    %104 = vmatpush.msra.mxu0 0.0
    %105 = vmatpush.msra.mxu0 0.0
    %106 = vmatpush.msra.mxu0 0.0
    %107 = vmatpush.msra.mxu0 %v89
    %108 = vmatpush.msra.mxu0 %v88
    %109 = vmatpush.msra.mxu0 %v87
    %110 = vmatpush.msra.mxu0 %v86
    %111 = vmatpush.msra.mxu0 %v85
    %112 = vmatpush.msra.mxu0 %v84
    %113 = vmatpush.msra.mxu0 %v83
    %114 = vmatpush.msra.mxu0 %v82
    %115 = vmatmul.f32.gmra.mxu0 %v94
    %v116 = vpop.f32.mrf.mxu0
    %v117 = vadd.f32 %v91, %v116
    %118 = vmatmul.f32.gmra.mxu0 %v97
    %v119 = vpop.f32.mrf.mxu0
    %v120 = vadd.f32 %v91, %v119
    %121 = vdwg.mxu0
    %v122 = vmax.f32 %v117, 0.0
    %v123 = vmax.f32 %v120, 0.0
    %v124 = vld [vmem:[#allocation5 + $0x48] sm:$0xff]
    %v125 = vld [vmem:[#allocation5 + $0x50] sm:$0xff]
    %v126 = vld [vmem:[#allocation5 + $0x58] sm:$0xff]
    %v127 = vld [vmem:[#allocation5 + $0x60] sm:$0xff]
    %v128 = vld [vmem:[#allocation5 + $0x68] sm:$0xff]
    %v129 = vld [vmem:[#allocation5 + $0x70] sm:$0xff]
    %v130 = vld [vmem:[#allocation5 + $0x78] sm:$0xff]
    %v131 = vld [vmem:[#allocation5 + $0x80] sm:$0xff]
    %v132 = vld [vmem:[#allocation5 + $0xfa] sm:$0x1]
    %v133 = vperm.slane %v132, 0
    %v135 = vsel %vm92, %v122, 0
    %v138 = vsel %vm92, %v123, 0
    %140 = vmatpush.msra.mxu0 0.0
    %141 = vmatpush.msra.mxu0 0.0
    %142 = vmatpush.msra.mxu0 0.0
    %143 = vmatpush.msra.mxu0 0.0
    %144 = vmatpush.msra.mxu0 0.0
    %145 = vmatpush.msra.mxu0 0.0
    %146 = vmatpush.msra.mxu0 0.0
    %147 = vmatpush.msra.mxu0 0.0
    %148 = vmatpush.msra.mxu0 %v131
    %149 = vmatpush.msra.mxu0 %v130
    %150 = vmatpush.msra.mxu0 %v129
    %151 = vmatpush.msra.mxu0 %v128
    %152 = vmatpush.msra.mxu0 %v127
    %153 = vmatpush.msra.mxu0 %v126
    %154 = vmatpush.msra.mxu0 %v125
    %155 = vmatpush.msra.mxu0 %v124
    %156 = vmatmul.f32.gmra.mxu0 %v135
    %v157 = vpop.f32.mrf.mxu0
    %v158 = vadd.f32 %v133, %v157
    %159 = vmatmul.f32.gmra.mxu0 %v138
    %v160 = vpop.f32.mrf.mxu0
    %v161 = vadd.f32 %v133, %v160
    %162 = vdwg.mxu0
    %v163 = vld [vmem:[#allocation5 + $0x88] sm:$0xff]
    %v164 = vld [vmem:[#allocation5 + $0x90] sm:$0xff]
    %v165 = vld [vmem:[#allocation5 + $0xfb] sm:$0x1]
    %v166 = vperm.slane %v165, 0
    %vm167 = vcmask 130048
    %v169 = vsel %vm167, %v46, 0
    %171 = vmatpush.msra.mxu0 0.0
    %172 = vmatpush.msra.mxu0 0.0
    %173 = vmatpush.msra.mxu0 0.0
    %174 = vmatpush.msra.mxu0 0.0
    %175 = vmatpush.msra.mxu0 0.0
    %176 = vmatpush.msra.mxu0 0.0
    %177 = vmatpush.msra.mxu0 0.0
    %178 = vmatpush.msra.mxu0 0.0
    %179 = vmatpush.msra.mxu0 0.0
    %180 = vmatpush.msra.mxu0 0.0
    %181 = vmatpush.msra.mxu0 0.0
    %182 = vmatpush.msra.mxu0 0.0
    %183 = vmatpush.msra.mxu0 0.0
    %184 = vmatpush.msra.mxu0 0.0
    %185 = vmatpush.msra.mxu0 %v164
    %186 = vmatpush.msra.mxu0 %v163
    %187 = vmatmul.f32.gmra.mxu0 %v169
    %v188 = vpop.f32.mrf.mxu0
    %v189 = vadd.f32 %v166, %v188
    %190 = vdwg.mxu0
    %v191 = vmax.f32 %v189, 0.0
    %v192 = vld [vmem:[#allocation5 + $0x98] sm:$0xff]
    %v193 = vld [vmem:[#allocation5 + $0xa0] sm:$0xff]
    %v194 = vld [vmem:[#allocation5 + $0xa8] sm:$0xff]
    %v195 = vld [vmem:[#allocation5 + $0xb0] sm:$0xff]
    %v196 = vld [vmem:[#allocation5 + $0xfc] sm:$0x1]
    %v197 = vperm.slane %v196, 0
    %vm198 = vcmask 261120
    %v200 = vsel %vm198, %v191, 0
    %202 = vmatpush.msra.mxu0 0.0
    %203 = vmatpush.msra.mxu0 0.0
    %204 = vmatpush.msra.mxu0 0.0
    %205 = vmatpush.msra.mxu0 0.0
    %206 = vmatpush.msra.mxu0 0.0
    %207 = vmatpush.msra.mxu0 0.0
    %208 = vmatpush.msra.mxu0 0.0
    %209 = vmatpush.msra.mxu0 0.0
    %210 = vmatpush.msra.mxu0 0.0
    %211 = vmatpush.msra.mxu0 0.0
    %212 = vmatpush.msra.mxu0 0.0
    %213 = vmatpush.msra.mxu0 0.0
    %214 = vmatpush.msra.mxu0 %v195
    %215 = vmatpush.msra.mxu0 %v194
    %216 = vmatpush.msra.mxu0 %v193
    %217 = vmatpush.msra.mxu0 %v192
    %218 = vmatmul.f32.gmra.mxu0 %v200
    %v219 = vpop.f32.mrf.mxu0
    %v220 = vadd.f32 %v197, %v219
    %221 = vdwg.mxu0
    %v222 = vmax.f32 %v220, 0.0
    %v223 = vld [vmem:[#allocation5 + $0xb8] sm:$0xff]
    %v224 = vld [vmem:[#allocation5 + $0xc0] sm:$0xff]
    %v225 = vld [vmem:[#allocation5 + $0xc8] sm:$0xff]
    %v226 = vld [vmem:[#allocation5 + $0xd0] sm:$0xff]
    %v227 = vld [vmem:[#allocation5 + $0xfd] sm:$0x1]
    %v228 = vperm.slane %v227, 0
    %v230 = vsel %vm198, %v222, 0
    %232 = vmatpush.msra.mxu0 0.0
    %233 = vmatpush.msra.mxu0 0.0
    %234 = vmatpush.msra.mxu0 0.0
    %235 = vmatpush.msra.mxu0 0.0
    %236 = vmatpush.msra.mxu0 0.0
    %237 = vmatpush.msra.mxu0 0.0
    %238 = vmatpush.msra.mxu0 0.0
    %239 = vmatpush.msra.mxu0 0.0
    %240 = vmatpush.msra.mxu0 0.0
    %241 = vmatpush.msra.mxu0 0.0
    %242 = vmatpush.msra.mxu0 0.0
    %243 = vmatpush.msra.mxu0 0.0
    %244 = vmatpush.msra.mxu0 %v226
    %245 = vmatpush.msra.mxu0 %v225
    %246 = vmatpush.msra.mxu0 %v224
    %247 = vmatpush.msra.mxu0 %v223
    %248 = vmatmul.f32.gmra.mxu0 %v230
    %v249 = vpop.f32.mrf.mxu0
    %v250 = vadd.f32 %v228, %v249
    %251 = vdwg.mxu0
    %v252 = vld [vmem:[#allocation5 + $0xd8] sm:$0xff]
    %v253 = vld [vmem:[#allocation5 + $0xe0] sm:$0xff]
    %v254 = vld [vmem:[#allocation5 + $0xe8] sm:$0xff]
    %v255 = vld [vmem:[#allocation5 + $0xf0] sm:$0xff]
    %v256 = vld [vmem:[#allocation5 + $0xfe] sm:$0x1]
    %v258 = vsel %vm50, %v161, 0
    %260 = vmatpush.msra.mxu0 0.0
    %261 = vmatpush.msra.mxu0 0.0
    %262 = vmatpush.msra.mxu0 0.0
    %263 = vmatpush.msra.mxu0 0.0
    %264 = vmatpush.msra.mxu0 0.0
    %265 = vmatpush.msra.mxu0 0.0
    %266 = vmatpush.msra.mxu0 0.0
    %267 = vmatpush.msra.mxu0 0.0
    %268 = vmatpush.msra.mxu0 0.0
    %269 = vmatpush.msra.mxu0 0.0
    %270 = vmatpush.msra.mxu0 0.0
    %271 = vmatpush.msra.mxu0 0.0
    %272 = vmatpush.msra.mxu0 0.0
    %273 = vmatpush.msra.mxu0 0.0
    %274 = vmatpush.msra.mxu0 0.0
    %275 = vmatpush.msra.mxu0 %v253
    %276 = vmatmul.f32.gmra.mxu0 %v258
    %v277 = vpop.f32.mrf.mxu0
    %v278 = vadd.f32 0.0, %v277
    %279 = vdwg.mxu0
    %v281 = vsel %vm50, %v158, 0
    %283 = vmatpush.msra.mxu0 0.0
    %284 = vmatpush.msra.mxu0 0.0
    %285 = vmatpush.msra.mxu0 0.0
    %286 = vmatpush.msra.mxu0 0.0
    %287 = vmatpush.msra.mxu0 0.0
    %288 = vmatpush.msra.mxu0 0.0
    %289 = vmatpush.msra.mxu0 0.0
    %290 = vmatpush.msra.mxu0 0.0
    %291 = vmatpush.msra.mxu0 0.0
    %292 = vmatpush.msra.mxu0 0.0
    %293 = vmatpush.msra.mxu0 0.0
    %294 = vmatpush.msra.mxu0 0.0
    %295 = vmatpush.msra.mxu0 0.0
    %296 = vmatpush.msra.mxu0 0.0
    %297 = vmatpush.msra.mxu0 0.0
    %298 = vmatpush.msra.mxu0 %v252
    %299 = vmatmul.f32.gmra.mxu0 %v281
    %v300 = vpop.f32.mrf.mxu0
    %v301 = vadd.f32 %v278, %v300
    %302 = vdwg.mxu0
    %v304 = vsel %vm167, %v250, 0
    %306 = vmatpush.msra.mxu0 0.0
    %307 = vmatpush.msra.mxu0 0.0
    %308 = vmatpush.msra.mxu0 0.0
    %309 = vmatpush.msra.mxu0 0.0
    %310 = vmatpush.msra.mxu0 0.0
    %311 = vmatpush.msra.mxu0 0.0
    %312 = vmatpush.msra.mxu0 0.0
    %313 = vmatpush.msra.mxu0 0.0
    %314 = vmatpush.msra.mxu0 0.0
    %315 = vmatpush.msra.mxu0 0.0
    %316 = vmatpush.msra.mxu0 0.0
    %317 = vmatpush.msra.mxu0 0.0
    %318 = vmatpush.msra.mxu0 0.0
    %319 = vmatpush.msra.mxu0 0.0
    %320 = vmatpush.msra.mxu0 %v255
    %321 = vmatpush.msra.mxu0 %v254
    %322 = vmatmul.f32.gmra.mxu0 %v304
    %v323 = vpop.f32.mrf.mxu0
    %v324 = vadd.f32 0.0, %v323
    %325 = vdwg.mxu0
    %v326 = vadd.f32 %v301, %v324
    %v327 = vperm.slane %v256, 0
    %v328 = vadd.f32 %v326, %v327
    %v329 = vlaneseq
    %v330 = vand.u32 %v329, 127
    %vm331 = vcmp.lt.s32.totalorder %v330, 4
    %v332 = vsel %vm331, %v328, -1e+30
    %333 = vmax.xlane.f32.xlu0 %v332
    %v334 = vpop.xlane.xlu0 %333
    %v335 = vsub.f32 %v332, %v334
    %v336 = vmul.f32 %v335, 1.442695
    %v337 = vpow.pop %v336
    %338 = vadd.xlane.f32.xlu0 %v337
    %v339 = vpop.xlane.xlu0 %338
    %v340 = vrcp.pop %v339
    %v341 = vmul.f32 %v339, %v340
    %v342 = vsub.f32 1.0, %v341
    %v343 = vmul.f32 %v340, %v342
    %v344 = vadd.f32 %v340, %v343
    %vm345 = vweird.f32 %v339
    %vm346 = vweird.f32 %v340
    %vm347 = vmor %vm345, %vm346
    %v348 = vsel %vm347, %v340, %v344
    %v349 = vand.u32 2147483647, %v339
    %vm350 = vcmp.eq.f32.partialorder %v349, 8.507059e+37
    %v351 = vand.u32 %v339, 2147483648
    %v352 = vor.u32 1.1754944e-38, %v351
    %v353 = vsel %vm350, %v352, %v348
    %v354 = vmul.f32 %v337, %v353
    %v355 = vrot.slane %v354, 4
    %v356 = vadd.f32 %v354, %v355
    %v357 = vrot.slane %v356, 2
    %v358 = vadd.f32 %v356, %v357
    %v359 = vrot.slane %v358, 1
    %v360 = vadd.f32 %v358, %v359
    %v361 = vrcp.pop 8.0
    %v362 = vmul.f32 8.0, %v361
    %v363 = vsub.f32 1.0, %v362
    %v364 = vmul.f32 %v361, %v363
    %v365 = vadd.f32 %v361, %v364
    %vm366 = vweird.f32 %v361
    %v367 = vsel %vm366, %v361, %v365
    %v368 = vmul.f32 %v360, %v367
    %v369 = vadd.f32 %v368, 0.05
    %v370 = vsel %vm331, %v369, 0.0
    %vm371 = vcmask 1040384
    %v372 = vsel %vm371, %v370, 0.0
    %373 = vadd.xlane.f32.xlu0 %v372
    %v374 = vpop.xlane.xlu0 %373
    %v375 = vrot.slane %v374, 4
    %v376 = vadd.f32 %v374, %v375
    %v377 = vrot.slane %v376, 2
    %v378 = vadd.f32 %v376, %v377
    %v379 = vrot.slane %v378, 1
    %v380 = vadd.f32 %v378, %v379
    %s381 = vtos %v380
    %v382 = vstv %s381
    %v383 = vrcp.pop %v382
    %v384 = vmul.f32 %v382, %v383
    %v385 = vsub.f32 1.0, %v384
    %v386 = vmul.f32 %v383, %v385
    %v387 = vadd.f32 %v383, %v386
    %vm388 = vweird.f32 %v382
    %vm389 = vweird.f32 %v383
    %vm390 = vmor %vm388, %vm389
    %v391 = vsel %vm390, %v383, %v387
    %v392 = vand.u32 2147483647, %v382
    %vm393 = vcmp.eq.f32.partialorder %v392, 8.507059e+37
    %v394 = vand.u32 %v382, 2147483648
    %v395 = vor.u32 1.1754944e-38, %v394
    %v396 = vsel %vm393, %v395, %v391
    %v397 = vmul.f32 %v370, %v396
    %398 = vst [vmem:[#allocation7] sm:$0x1] %v397
    // Predicated region
    $region18: #{tpu_custom_call.1} parent=1 // pred_check
      _
    $region19: #{tpu_custom_call.1} parent=1 // pred_check_branch
      %400 = sbr.rel (0) target = $region21
    $region20: #{tpu_custom_call.1} parent=1 // pred_region
      %402 = vsyncadd [#allocation4], 0
      %s404 = sshll.u32 [#allocation7], 4
      %s405 = int_to_ptr.vmem [resolvable:$true] %s404
      %s406 = sshll.u32 %s2, 4
      %s407 = int_to_ptr.hbm [resolvable:$true] %s406
      %409 = dma.vmem_to_hbm [thread:$0]  %s405, 16, %s407, [#allocation4]
    $region21: #{tpu_custom_call.1} parent=1 // pred_fallthru
      _
    // Predicated region
    $region22: #{tpu_custom_call.1} parent=1 // pred_check
      _
    $region23: #{tpu_custom_call.1} parent=1 // pred_check_branch
      %411 = sbr.rel (0) target = $region25
    $region24: #{tpu_custom_call.1} parent=1 // pred_region
      %413 = dma.done [#allocation4], 16
    $region25: #{tpu_custom_call.1} parent=1 // pred_fallthru
      _
    %414 = vsyncpa [#allocation3], 1
    %415 = vsyncpa [#allocation6], 1
    %416 = vsyncpa [#allocation4], 1

</llo_original>
